<compile_context>
chip_gen: v6e
topology: v6e:2x2x1
jax: 0.10.0
libtpu: 0.0.40
codegen_flags: <defaults>
</compile_context>

<pallas_src>
import functools

import jax
import jax.numpy as jnp
from jax.experimental import pallas as pl
from jax.experimental.pallas import tpu as pltpu


def _encoder_kernel(x_ref, w_ref, b_ref, eps_ref, z_ref, *, latent_dim):
    x = x_ref[...]                                          # (tm, F) f32
    # Fused mean|std heads: one MXU matmul on concatenated weights.
    y = jnp.dot(x, w_ref[...], preferred_element_type=jnp.float32)
    y = y + b_ref[...]                                      # (tm, 2*latent)
    m = y[:, :latent_dim]                                   # mean head
    s = jnp.maximum(y[:, latent_dim:], 0.0) + 1e-4          # relu(std) + 1e-4
    z_ref[...] = eps_ref[...] * s + m                       # reparameterize


def feature_encoder_forward(x, w_mean, b_mean, w_std, b_std, eps, *, tm=128):
    """x: (N, F); w_*: (F, latent); b_*: (latent,); eps: (N, latent) -> z (N, latent)."""
    n, f = x.shape
    latent = w_mean.shape[1]

    # One lane-dense concatenated weight/bias for the fused head matmul.
    w_cat = jnp.concatenate([w_mean, w_std], axis=1)              # (F, 2*latent)
    b_cat = jnp.concatenate([b_mean, b_std], axis=0).reshape(1, 2 * latent)

    tm = min(tm, n)
    assert n % tm == 0, "demo wrapper assumes N divisible by the row tile"
    grid = (n // tm,)

    kernel = functools.partial(_encoder_kernel, latent_dim=latent)

    cost = pl.CostEstimate(
        flops=2 * n * f * (2 * latent) + 4 * n * latent,
        transcendentals=0,
        bytes_accessed=4 * (x.size + w_cat.size + b_cat.size + eps.size + n * latent),
    )

    z = pl.pallas_call(
        kernel,
        out_shape=jax.ShapeDtypeStruct((n, latent), jnp.float32),
        grid=grid,
        in_specs=[
            pl.BlockSpec((tm, f), lambda i: (i, 0)),              # x row tile (streamed)
            pl.BlockSpec((f, 2 * latent), lambda i: (0, 0)),      # fused weights (resident)
            pl.BlockSpec((1, 2 * latent), lambda i: (0, 0)),      # fused bias (resident)
            pl.BlockSpec((tm, latent), lambda i: (i, 0)),         # eps row tile (streamed)
        ],
        out_specs=pl.BlockSpec((tm, latent), lambda i: (i, 0)),   # z row tile, lane-dense
        compiler_params=pltpu.CompilerParams(
            dimension_semantics=("parallel",),                    # megacore on v7x
        ),
        cost_estimate=cost,
    )(x, w_cat, b_cat, eps)
    return z


if __name__ == "__main__":
    # Small shapes consistent with the module: latent_dim default = 128.
    N = 256          # number of rows (nodes / samples)
    IN_FEAT = 16     # in_feature.shape[1]
    LATENT = 128     # latent_dim (module default)
    TM = 128         # row tile -> grid of 2 steps

    key = jax.random.PRNGKey(0)
    k_x, k_wm, k_bm, k_ws, k_bs, k_eps = jax.random.split(key, 6)

    x = jax.random.normal(k_x, (N, IN_FEAT), dtype=jnp.float32)

    # Linear weights stored as (in, out) = W^T of the torch (out, in) layout.
    scale = 1.0 / jnp.sqrt(IN_FEAT)
    w_mean = jax.random.normal(k_wm, (IN_FEAT, LATENT), dtype=jnp.float32) * scale
    b_mean = jax.random.normal(k_bm, (LATENT,), dtype=jnp.float32) * scale
    w_std = jax.random.normal(k_ws, (IN_FEAT, LATENT), dtype=jnp.float32) * scale
    b_std = jax.random.normal(k_bs, (LATENT,), dtype=jnp.float32) * scale

    # eps ~ N(0,1), same shape as std (torch.randn_like).
    eps = jax.random.normal(k_eps, (N, LATENT), dtype=jnp.float32)

    z = feature_encoder_forward(x, w_mean, b_mean, w_std, b_std, eps, tm=TM)
    jax.block_until_ready(z)

    # Pure-JAX reference.
    m_ref = x @ w_mean + b_mean
    s_ref = jnp.maximum(x @ w_std + b_std, 0.0) + 1e-4
    z_ref = eps * s_ref + m_ref

    assert z.shape == (N, LATENT)
    assert jnp.allclose(z, z_ref, atol=1e-4, rtol=1e-4)

    print("KERNEL_OK")
</pallas_src>

<mosaic_0001>
module attributes {stable_mosaic.version = 11 : i64} {
  func.func @_encoder_kernel(%arg0: i32, %arg1: memref<128x16xf32, #tpu.memory_space<vmem>>, %arg2: memref<16x256xf32, #tpu.memory_space<vmem>>, %arg3: memref<1x256xf32, #tpu.memory_space<vmem>>, %arg4: memref<128x128xf32, #tpu.memory_space<vmem>>, %arg5: memref<128x128xf32, #tpu.memory_space<vmem>>) attributes {dimension_semantics = [#tpu.dimension_semantics<parallel>], iteration_bounds = array<i64: 2>, scalar_prefetch = 0 : i64, scratch_operands = 0 : i64, tpu.core_type = #tpu.core_type<tc>, window_params = [{transform_indices = @transform_0, window_bounds = array<i64: 128, 16>}, {pipeline_mode = #tpu.pipeline_mode<synchronous>, transform_indices = @transform_1, window_bounds = array<i64: 16, 256>}, {pipeline_mode = #tpu.pipeline_mode<synchronous>, transform_indices = @transform_2, window_bounds = array<i64: 1, 256>}, {transform_indices = @transform_3, window_bounds = array<i64: 128, 128>}, {transform_indices = @transform_4, window_bounds = array<i64: 128, 128>}]} {
    %c0 = arith.constant 0 : index
    %c0_0 = arith.constant 0 : index
    %0 = vector.load %arg1[%c0, %c0_0] : memref<128x16xf32, #tpu.memory_space<vmem>>, vector<128x16xf32>
    %c0_1 = arith.constant 0 : index
    %c0_2 = arith.constant 0 : index
    %1 = vector.load %arg2[%c0_1, %c0_2] : memref<16x256xf32, #tpu.memory_space<vmem>>, vector<16x256xf32>
    %cst = arith.constant dense<0.000000e+00> : vector<128x256xf32>
    %2 = tpu.matmul %0, %1, %cst {dimension_numbers = #tpu.dot_dimension_numbers<[1], [0], [0], [1], [0, 0, 1, 1], [], []>} : vector<128x16xf32>, vector<16x256xf32>, vector<128x256xf32> -> vector<128x256xf32>
    %c0_3 = arith.constant 0 : index
    %c0_4 = arith.constant 0 : index
    %3 = vector.load %arg3[%c0_3, %c0_4] : memref<1x256xf32, #tpu.memory_space<vmem>>, vector<1x256xf32>
    %4 = vector.broadcast %3 : vector<1x256xf32> to vector<128x256xf32>
    %5 = arith.addf %2, %4 : vector<128x256xf32>
    %6 = vector.extract_strided_slice %5 {offsets = [0, 0], sizes = [128, 128], strides = [1, 1]} : vector<128x256xf32> to vector<128x128xf32>
    %7 = vector.extract_strided_slice %5 {offsets = [0, 128], sizes = [128, 128], strides = [1, 1]} : vector<128x256xf32> to vector<128x128xf32>
    %cst_5 = arith.constant 0.000000e+00 : f32
    %8 = vector.broadcast %cst_5 : f32 to vector<128x128xf32>
    %9 = arith.maximumf %7, %8 : vector<128x128xf32>
    %cst_6 = arith.constant 9.99999974E-5 : f32
    %10 = vector.broadcast %cst_6 : f32 to vector<128x128xf32>
    %11 = arith.addf %9, %10 : vector<128x128xf32>
    %c0_7 = arith.constant 0 : index
    %c0_8 = arith.constant 0 : index
    %12 = vector.load %arg4[%c0_7, %c0_8] : memref<128x128xf32, #tpu.memory_space<vmem>>, vector<128x128xf32>
    %13 = arith.mulf %12, %11 : vector<128x128xf32>
    %14 = arith.addf %13, %6 : vector<128x128xf32>
    %c0_9 = arith.constant 0 : index
    %c0_10 = arith.constant 0 : index
    %15 = vector.load %arg5[%c0_9, %c0_10] : memref<128x128xf32, #tpu.memory_space<vmem>>, vector<128x128xf32>
    tpu.vector_store %arg5[%c0_9, %c0_10], %14 {strides = array<i32>} : memref<128x128xf32, #tpu.memory_space<vmem>>, vector<128x128xf32>,
    return
  }
  func.func @transform_0(%arg0: i32) -> (i32, i32) {
    %c0_i32 = arith.constant 0 : i32
    %c0_i32_0 = arith.constant 0 : i32
    return %arg0, %c0_i32 : i32, i32
  }
  func.func @transform_1(%arg0: i32) -> (i32, i32) {
    %c0_i32 = arith.constant 0 : i32
    %c0_i32_0 = arith.constant 0 : i32
    %c0_i32_1 = arith.constant 0 : i32
    return %c0_i32, %c0_i32_0 : i32, i32
  }
  func.func @transform_2(%arg0: i32) -> (i32, i32) {
    %c0_i32 = arith.constant 0 : i32
    %c0_i32_0 = arith.constant 0 : i32
    %c0_i32_1 = arith.constant 0 : i32
    return %c0_i32, %c0_i32_0 : i32, i32
  }
  func.func @transform_3(%arg0: i32) -> (i32, i32) {
    %c0_i32 = arith.constant 0 : i32
    %c0_i32_0 = arith.constant 0 : i32
    return %arg0, %c0_i32 : i32, i32
  }
  func.func @transform_4(%arg0: i32) -> (i32, i32) {
    %c0_i32 = arith.constant 0 : i32
    %c0_i32_0 = arith.constant 0 : i32
    return %arg0, %c0_i32 : i32, i32
  }
}

</mosaic_0001>

<llo_original>
// kernel: tpu_custom_call.1
$region0: #{tpu_custom_call.1}
  #allocation0 [shape = 'u32[]', space=smem, size = 0x4, offset = 0x4, fixed_abs, tag = 'smem constant byte address 0x4 - core index']
  #allocation1 [shape = 'u32[144,128]{1,0:T(1,128)}', space=vmem, size = 0x12000, scoped, tag = 'internal scratch']
  %s0 = inlined_call_operand.vmem [shape: f32[256,16], index: 0, kind: input, shape index: {}]
  %s1 = inlined_call_operand.vmem [shape: f32[16,256], index: 1, kind: input, shape index: {}]
  %s2 = inlined_call_operand.vmem [shape: f32[1,256], index: 2, kind: input, shape index: {}]
  %s3 = inlined_call_operand.vmem [shape: f32[256,128], index: 3, kind: input, shape index: {}]
  %s4 = inlined_call_operand.hbm [shape: f32[256,128], index: 4, kind: output, shape index: {}]
  %s5 = sld [smem:[#allocation0]]
  $region49: #{tpu_custom_call.1} parent=0
    _
  %s7 = ssub.s32 1, %s5
  %s8 = scalar_select 0, %s7, %s5
  $region1: #{tpu_custom_call.1} parent=0
    #allocation2 [shape = 'u8[131072]{0}', space=vmem, size = 0x20000, scoped, tag = 'output window, operand 0']
    #allocation3 [shape = 's32[2]{0}', space=sflag, size = 0x8, scoped, tag = 'scoped memory for tpu_custom_call.1']
    %9 = vsyncpa [#allocation3], 0
    %s10 = scalar_lea.sflag [#allocation3], 1
    %11 = vsyncpa %s10, 0
    loop: start=0, step=1, limit=4
    $region2: #{tpu_custom_call.1} parent=1 // loop_pre_header
      _
    $region3: #{tpu_custom_call.1} parent=1 // loop_header
      %s13 = sphi 0, %s17
      %p14 = scmp.ge.s32.totalorder %s13, 4
      %s23 = sphi 0, %s25
      %s26 = sphi 0, %s23
      %s27 = sphi 0, %s26
      %s43 = sphi 0, %s27
      %s47 = sphi 0, %s47
      %s49 = sphi 0, %s47
      %s50 = sphi 0, %s49
      %s64 = sphi 0, %s50
      %s68 = sphi 0, %s68
      %s70 = sphi 0, %s68
      %s71 = sphi 0, %s70
      %s85 = sphi 0, %s71
      %s91 = sphi 0, %s93
      %s94 = sphi 0, %s91
      %s95 = sphi 0, %s94
      %s111 = sphi 0, %s95
      %s117 = sphi 0, %s119
      %s120 = sphi 0, %s117
      %s121 = sphi 0, %s120
      %s137 = sphi 0, %s121
    $region4: #{tpu_custom_call.1} parent=1 // loop_header_branch
      %16 = sbr.rel (%p14) target = $region8
    $region5: #{tpu_custom_call.1} parent=1 // loop_body
      %s18 = ssub.s32 %s13, 1
      %s19 = ssub.s32 %s13, 2
      %s20 = sadd.s32 %s13, 1
      %s21 = ssub.s32 %s13, %s20
      %p22 = scmp.eq.s32.totalorder %s21, 0
      %s24 = sadd.s32 %s23, 1
      %s25 = scalar_select %p22, %s23, %s24
      %p28 = pneg %p22
      %p29 = scmp.eq.s32.totalorder %s13, 1
      %p30 = por %p28, %p29
      %p31 = scmp.ne.s32.totalorder %s23, %s26
      %p32 = scmp.eq.s32.totalorder %s13, 0
      %p33 = por %p31, %p32
      %p34 = scmp.ne.s32.totalorder %s23, %s26
      %p35 = scmp.eq.s32.totalorder %s18, 1
      %p36 = por %p34, %p35
      %p37 = scmp.ne.s32.totalorder %s26, %s27
      %p38 = scmp.eq.s32.totalorder %s18, 0
      %p39 = por %p37, %p38
      %p40 = scmp.ne.s32.totalorder %s26, %s27
      %p41 = scmp.eq.s32.totalorder %s19, 1
      %p42 = por %p40, %p41
      %p44 = scmp.ne.s32.totalorder %s27, %s43
      %p45 = scmp.eq.s32.totalorder %s19, 0
      %p46 = por %p44, %p45
      %s48 = sadd.s32 %s47, 1
      %p51 = scmp.eq.s32.totalorder %s13, 1
      %p52 = scmp.ne.s32.totalorder %s47, %s49
      %p53 = scmp.eq.s32.totalorder %s13, 0
      %p54 = por %p52, %p53
      %p55 = scmp.ne.s32.totalorder %s47, %s49
      %p56 = scmp.eq.s32.totalorder %s18, 1
      %p57 = por %p55, %p56
      %p58 = scmp.ne.s32.totalorder %s49, %s50
      %p59 = scmp.eq.s32.totalorder %s18, 0
      %p60 = por %p58, %p59
      %p61 = scmp.ne.s32.totalorder %s49, %s50
      %p62 = scmp.eq.s32.totalorder %s19, 1
      %p63 = por %p61, %p62
      %p65 = scmp.ne.s32.totalorder %s50, %s64
      %p66 = scmp.eq.s32.totalorder %s19, 0
      %p67 = por %p65, %p66
      %s69 = sadd.s32 %s68, 1
      %p72 = scmp.eq.s32.totalorder %s13, 1
      %p73 = scmp.ne.s32.totalorder %s68, %s70
      %p74 = scmp.eq.s32.totalorder %s13, 0
      %p75 = por %p73, %p74
      %p76 = scmp.ne.s32.totalorder %s68, %s70
      %p77 = scmp.eq.s32.totalorder %s18, 1
      %p78 = por %p76, %p77
      %p79 = scmp.ne.s32.totalorder %s70, %s71
      %p80 = scmp.eq.s32.totalorder %s18, 0
      %p81 = por %p79, %p80
      %p82 = scmp.ne.s32.totalorder %s70, %s71
      %p83 = scmp.eq.s32.totalorder %s19, 1
      %p84 = por %p82, %p83
      %p86 = scmp.ne.s32.totalorder %s71, %s85
      %p87 = scmp.eq.s32.totalorder %s19, 0
      %p88 = por %p86, %p87
      %s89 = ssub.s32 %s13, %s20
      %p90 = scmp.eq.s32.totalorder %s89, 0
      %s92 = sadd.s32 %s91, 1
      %s93 = scalar_select %p90, %s91, %s92
      %p96 = pneg %p90
      %p97 = scmp.eq.s32.totalorder %s13, 1
      %p98 = por %p96, %p97
      %p99 = scmp.ne.s32.totalorder %s91, %s94
      %p100 = scmp.eq.s32.totalorder %s13, 0
      %p101 = por %p99, %p100
      %p102 = scmp.ne.s32.totalorder %s91, %s94
      %p103 = scmp.eq.s32.totalorder %s18, 1
      %p104 = por %p102, %p103
      %p105 = scmp.ne.s32.totalorder %s94, %s95
      %p106 = scmp.eq.s32.totalorder %s18, 0
      %p107 = por %p105, %p106
      %p108 = scmp.ne.s32.totalorder %s94, %s95
      %p109 = scmp.eq.s32.totalorder %s19, 1
      %p110 = por %p108, %p109
      %p112 = scmp.ne.s32.totalorder %s95, %s111
      %p113 = scmp.eq.s32.totalorder %s19, 0
      %p114 = por %p112, %p113
      %s115 = ssub.s32 %s13, %s20
      %p116 = scmp.eq.s32.totalorder %s115, 0
      %s118 = sadd.s32 %s117, 1
      %s119 = scalar_select %p116, %s117, %s118
      %p122 = pneg %p116
      %p123 = scmp.eq.s32.totalorder %s13, 1
      %p124 = por %p122, %p123
      %p125 = scmp.ne.s32.totalorder %s117, %s120
      %p126 = scmp.eq.s32.totalorder %s13, 0
      %p127 = por %p125, %p126
      %p128 = scmp.ne.s32.totalorder %s117, %s120
      %p129 = scmp.eq.s32.totalorder %s18, 1
      %p130 = por %p128, %p129
      %p131 = scmp.ne.s32.totalorder %s120, %s121
      %p132 = scmp.eq.s32.totalorder %s18, 0
      %p133 = por %p131, %p132
      %p134 = scmp.ne.s32.totalorder %s120, %s121
      %p135 = scmp.eq.s32.totalorder %s19, 1
      %p136 = por %p134, %p135
      %p138 = scmp.ne.s32.totalorder %s121, %s137
      %p139 = scmp.eq.s32.totalorder %s19, 0
      %p140 = por %p138, %p139
      %p141 = scmp.le.s32.totalorder 1, %s13
      %p142 = scmp.lt.s32.totalorder %s13, 3
      %p143 = pnand %p141, %p142
      %p144 = pneg %p143
      // Predicated region
      $region9: #{tpu_custom_call.1} parent=5 // pred_check
        _
      $region10: #{tpu_custom_call.1} parent=5 // pred_check_branch
        %146 = sbr.rel (%p143) target = $region12
      $region11: #{tpu_custom_call.1} parent=5 // pred_region
        %s147 = ssub.s32 %s13, 1
        // Predicated region
        $region13: #{tpu_custom_call.1} parent=11 // pred_check
          %p148 = pneg %p60
        $region14: #{tpu_custom_call.1} parent=11 // pred_check_branch
          %150 = sbr.rel (%p148) target = $region16
        $region15: #{tpu_custom_call.1} parent=11 // pred_region
          _
        $region16: #{tpu_custom_call.1} parent=11 // pred_fallthru
          _
        // Predicated region
        $region17: #{tpu_custom_call.1} parent=11 // pred_check
          %p151 = pneg %p81
        $region18: #{tpu_custom_call.1} parent=11 // pred_check_branch
          %153 = sbr.rel (%p151) target = $region20
        $region19: #{tpu_custom_call.1} parent=11 // pred_region
          _
        $region20: #{tpu_custom_call.1} parent=11 // pred_fallthru
          _
      $region12: #{tpu_custom_call.1} parent=5 // pred_fallthru
        _
      %p154 = scmp.lt.s32.totalorder %s13, 2
      // Predicated region
      $region21: #{tpu_custom_call.1} parent=5 // pred_check
        %p155 = pneg %p154
      $region22: #{tpu_custom_call.1} parent=5 // pred_check_branch
        %157 = sbr.rel (%p155) target = $region24
      $region23: #{tpu_custom_call.1} parent=5 // pred_region
        // Predicated region
        $region25: #{tpu_custom_call.1} parent=23 // pred_check
          %p158 = pneg %p33
        $region26: #{tpu_custom_call.1} parent=23 // pred_check_branch
          %160 = sbr.rel (%p158) target = $region28
        $region27: #{tpu_custom_call.1} parent=23 // pred_region
          %s161 = smul.u32 16, %s13
          %p162 = scmp.lt.s32.totalorder %s161, 31
          %s163 = scalar_select %p162, %s161, 31
          %s164 = smul.addr %s163, 8
          %s165 = scalar_lea.vmem %s0, %s164
          %s166 = smul.u32 16, %s13
        $region28: #{tpu_custom_call.1} parent=23 // pred_fallthru
          _
        // Predicated region
        $region29: #{tpu_custom_call.1} parent=23 // pred_check
          %p167 = pneg %p101
        $region30: #{tpu_custom_call.1} parent=23 // pred_check_branch
          %169 = sbr.rel (%p167) target = $region32
        $region31: #{tpu_custom_call.1} parent=23 // pred_region
          %s170 = smul.u32 16, %s13
          %p171 = scmp.lt.s32.totalorder %s170, 31
          %s172 = scalar_select %p171, %s170, 31
          %s173 = smul.addr %s172, 8
          %s174 = scalar_lea.vmem %s3, %s173
          %s175 = smul.u32 16, %s13
        $region32: #{tpu_custom_call.1} parent=23 // pred_fallthru
          _
      $region24: #{tpu_custom_call.1} parent=5 // pred_fallthru
        _
      %p176 = scmp.le.s32.totalorder 1, %s13
      %p177 = scmp.lt.s32.totalorder %s13, 3
      %p178 = pnand %p176, %p177
      %p179 = pneg %p178
      // Predicated region
      $region33: #{tpu_custom_call.1} parent=5 // pred_check
        _
      $region34: #{tpu_custom_call.1} parent=5 // pred_check_branch
        %181 = sbr.rel (%p178) target = $region36
      $region35: #{tpu_custom_call.1} parent=5 // pred_region
        %s182 = ssub.s32 %s13, 1
        %s183 = smul.u32 16, %s18
        %p184 = scmp.lt.s32.totalorder %s183, 31
        %s185 = scalar_select %p184, %s183, 31
        %s186 = smul.addr %s185, 8
        %s187 = scalar_lea.vmem %s0, %s186
        %p188 = pneg %p39
        %p189 = pneg %p36
        %p190 = pneg %p60
        %p191 = pneg %p57
        %p192 = pneg %p81
        %p193 = pneg %p78
        %s194 = smul.u32 16, %s18
        %p195 = scmp.lt.s32.totalorder %s194, 31
        %s196 = scalar_select %p195, %s194, 31
        %s197 = smul.addr %s196, 8
        %s198 = scalar_lea.vmem %s3, %s197
        %p199 = pneg %p107
        %p200 = pneg %p104
        %p201 = pneg %p133
        %p202 = pneg %p130
        %s203 = sand.u32 %s120, 1
        %s204 = scalar_lea.sflag [#allocation3], %s203
        %s205 = sand.u32 %s120, 1
        %s206 = smul.addr %s205, 128
        %s207 = scalar_lea.vmem [#allocation2], %s206
        %s208 = smul.u32 16, %s18
        %p209 = scmp.lt.s32.totalorder %s208, 31
        %s210 = scalar_select %p209, %s208, 31
        %s211 = smul.addr %s210, 8
        %s212 = scalar_lea.vmem %s0, %s211
        %s213 = smul.u32 16, %s18
        %s214 = smul.u32 16, %s18
        %p215 = scmp.lt.s32.totalorder %s214, 31
        %s216 = scalar_select %p215, %s214, 31
        %s217 = smul.addr %s216, 8
        %s218 = scalar_lea.vmem %s3, %s217
        %s219 = smul.u32 16, %s18
        %s220 = smul.u32 16, %s18
        %v221 = vld [vmem:[%s212] sm:$0xff]
        %v222 = vld [vmem:[%s212 + $0x8] sm:$0xff]
        %v223 = vld [vmem:[%s212 + $0x10] sm:$0xff]
        %v224 = vld [vmem:[%s212 + $0x18] sm:$0xff]
        %v225 = vld [vmem:[%s212 + $0x20] sm:$0xff]
        %v226 = vld [vmem:[%s212 + $0x28] sm:$0xff]
        %v227 = vld [vmem:[%s212 + $0x30] sm:$0xff]
        %v228 = vld [vmem:[%s212 + $0x38] sm:$0xff]
        %v229 = vld [vmem:[%s212 + $0x40] sm:$0xff]
        %v230 = vld [vmem:[%s212 + $0x48] sm:$0xff]
        %v231 = vld [vmem:[%s212 + $0x50] sm:$0xff]
        %v232 = vld [vmem:[%s212 + $0x58] sm:$0xff]
        %v233 = vld [vmem:[%s212 + $0x60] sm:$0xff]
        %v234 = vld [vmem:[%s212 + $0x68] sm:$0xff]
        %v235 = vld [vmem:[%s212 + $0x70] sm:$0xff]
        %v236 = vld [vmem:[%s212 + $0x78] sm:$0xff]
        %v237 = vld [vmem:[%s1] sm:$0xff]
        %v238 = vld [vmem:[%s1 + $0x8] sm:$0xff]
        %v239 = vld [vmem:[%s1 + $0x10] sm:$0xff]
        %v240 = vld [vmem:[%s1 + $0x18] sm:$0xff]
        %v241 = vld [vmem:[%s2] sm:$0x3]
        %v243 = vlaneseq
        %v244 = vshrl.u32 %v243, 7
        %v245 = vsub.s32 0, %v244
        %v246 = vrot.slane %v241, %v245
        %v247 = vlaneseq
        %v248 = vshrl.u32 %v247, 7
        %v249 = vsub.s32 1, %v248
        %v250 = vrot.slane %v241, %v249
        %vm253 = vcmask 130048
        %v255 = vsel %vm253, %v221, 0
        %v258 = vsel %vm253, %v222, 0
        %v261 = vsel %vm253, %v223, 0
        %v264 = vsel %vm253, %v224, 0
        %v267 = vsel %vm253, %v225, 0
        %v270 = vsel %vm253, %v226, 0
        %v273 = vsel %vm253, %v227, 0
        %v276 = vsel %vm253, %v228, 0
        %v279 = vsel %vm253, %v229, 0
        %v282 = vsel %vm253, %v230, 0
        %v285 = vsel %vm253, %v231, 0
        %v288 = vsel %vm253, %v232, 0
        %v291 = vsel %vm253, %v233, 0
        %v294 = vsel %vm253, %v234, 0
        %v297 = vsel %vm253, %v235, 0
        %v300 = vsel %vm253, %v236, 0
        %302 = vmatprep.subr.mxu0 0.0
        %303 = vmatpush1.msra.mxu0 0.0
        %304 = vmatprep.subr.mxu0 0.0
        %305 = vmatpush1.msra.mxu0 0.0
        %306 = vmatprep.subr.mxu0 0.0
        %307 = vmatpush1.msra.mxu0 0.0
        %308 = vmatprep.subr.mxu0 0.0
        %309 = vmatpush1.msra.mxu0 0.0
        %310 = vmatprep.subr.mxu0 0.0
        %311 = vmatpush1.msra.mxu0 0.0
        %312 = vmatprep.subr.mxu0 0.0
        %313 = vmatpush1.msra.mxu0 0.0
        %314 = vmatprep.subr.mxu0 0.0
        %315 = vmatpush1.msra.mxu0 0.0
        %316 = vmatprep.subr.mxu0 0.0
        %317 = vmatpush1.msra.mxu0 0.0
        %318 = vmatprep.subr.mxu0 0.0
        %319 = vmatpush1.msra.mxu0 0.0
        %320 = vmatprep.subr.mxu0 0.0
        %321 = vmatpush1.msra.mxu0 0.0
        %322 = vmatprep.subr.mxu0 0.0
        %323 = vmatpush1.msra.mxu0 0.0
        %324 = vmatprep.subr.mxu0 0.0
        %325 = vmatpush1.msra.mxu0 0.0
        %326 = vmatprep.subr.mxu0 0.0
        %327 = vmatpush1.msra.mxu0 0.0
        %328 = vmatprep.subr.mxu0 0.0
        %329 = vmatpush1.msra.mxu0 0.0
        %330 = vmatprep.subr.mxu0 %v240
        %331 = vmatpush1.msra.mxu0 %v239
        %332 = vmatprep.subr.mxu0 %v238
        %333 = vmatpush1.msra.mxu0 %v237
        %334 = vmatprep.subr.mxu0 0.0
        %335 = vmatpush2.msra.mxu0 0.0
        %336 = vmatprep.subr.mxu0 0.0
        %337 = vmatpush2.msra.mxu0 0.0
        %338 = vmatprep.subr.mxu0 0.0
        %339 = vmatpush2.msra.mxu0 0.0
        %340 = vmatprep.subr.mxu0 0.0
        %341 = vmatpush2.msra.mxu0 0.0
        %342 = vmatprep.subr.mxu0 0.0
        %343 = vmatpush2.msra.mxu0 0.0
        %344 = vmatprep.subr.mxu0 0.0
        %345 = vmatpush2.msra.mxu0 0.0
        %346 = vmatprep.subr.mxu0 0.0
        %347 = vmatpush2.msra.mxu0 0.0
        %348 = vmatprep.subr.mxu0 0.0
        %349 = vmatpush2.msra.mxu0 0.0
        %350 = vmatprep.subr.mxu0 0.0
        %351 = vmatpush2.msra.mxu0 0.0
        %352 = vmatprep.subr.mxu0 0.0
        %353 = vmatpush2.msra.mxu0 0.0
        %354 = vmatprep.subr.mxu0 0.0
        %355 = vmatpush2.msra.mxu0 0.0
        %356 = vmatprep.subr.mxu0 0.0
        %357 = vmatpush2.msra.mxu0 0.0
        %358 = vmatprep.subr.mxu0 0.0
        %359 = vmatpush2.msra.mxu0 0.0
        %360 = vmatprep.subr.mxu0 0.0
        %361 = vmatpush2.msra.mxu0 0.0
        %362 = vmatprep.subr.mxu0 0.0
        %363 = vmatpush2.msra.mxu0 0.0
        %364 = vmatprep.subr.mxu0 0.0
        %365 = vmatpush2.msra.mxu0 0.0
        %366 = vmatprep.mubr.f32.mxu0 0.0
        %367 = vmatmul.mubr.f32.gmra.mxu0 %v255
        %v368 = vpop.f32.mrf.mxu0
        %v369 = vadd.f32 %v246, %v368
        %v370 = vpop.f32.mrf.mxu0
        %v371 = vadd.f32 %v250, %v370
        %372 = vmatprep.mubr.f32.mxu0 0.0
        %373 = vmatmul.mubr.f32.gmra.mxu0 %v258
        %v374 = vpop.f32.mrf.mxu0
        %v375 = vadd.f32 %v246, %v374
        %v376 = vpop.f32.mrf.mxu0
        %v377 = vadd.f32 %v250, %v376
        %378 = vmatprep.mubr.f32.mxu0 0.0
        %379 = vmatmul.mubr.f32.gmra.mxu0 %v261
        %v380 = vpop.f32.mrf.mxu0
        %v381 = vadd.f32 %v246, %v380
        %v382 = vpop.f32.mrf.mxu0
        %v383 = vadd.f32 %v250, %v382
        %384 = vmatprep.mubr.f32.mxu0 0.0
        %385 = vmatmul.mubr.f32.gmra.mxu0 %v264
        %v386 = vpop.f32.mrf.mxu0
        %v387 = vadd.f32 %v246, %v386
        %v388 = vpop.f32.mrf.mxu0
        %v389 = vadd.f32 %v250, %v388
        %390 = vmatprep.mubr.f32.mxu0 0.0
        %391 = vmatmul.mubr.f32.gmra.mxu0 %v267
        %v392 = vpop.f32.mrf.mxu0
        %v393 = vadd.f32 %v246, %v392
        %v394 = vpop.f32.mrf.mxu0
        %v395 = vadd.f32 %v250, %v394
        %396 = vmatprep.mubr.f32.mxu0 0.0
        %397 = vmatmul.mubr.f32.gmra.mxu0 %v270
        %v398 = vpop.f32.mrf.mxu0
        %v399 = vadd.f32 %v246, %v398
        %v400 = vpop.f32.mrf.mxu0
        %v401 = vadd.f32 %v250, %v400
        %402 = vmatprep.mubr.f32.mxu0 0.0
        %403 = vmatmul.mubr.f32.gmra.mxu0 %v273
        %v404 = vpop.f32.mrf.mxu0
        %v405 = vadd.f32 %v246, %v404
        %v406 = vpop.f32.mrf.mxu0
        %v407 = vadd.f32 %v250, %v406
        %408 = vmatprep.mubr.f32.mxu0 0.0
        %409 = vmatmul.mubr.f32.gmra.mxu0 %v276
        %v410 = vpop.f32.mrf.mxu0
        %v411 = vadd.f32 %v246, %v410
        %v412 = vpop.f32.mrf.mxu0
        %v413 = vadd.f32 %v250, %v412
        %414 = vmatprep.mubr.f32.mxu0 0.0
        %415 = vmatmul.mubr.f32.gmra.mxu0 %v279
        %v416 = vpop.f32.mrf.mxu0
        %v417 = vadd.f32 %v246, %v416
        %v418 = vpop.f32.mrf.mxu0
        %v419 = vadd.f32 %v250, %v418
        %420 = vmatprep.mubr.f32.mxu0 0.0
        %421 = vmatmul.mubr.f32.gmra.mxu0 %v282
        %v422 = vpop.f32.mrf.mxu0
        %v423 = vadd.f32 %v246, %v422
        %v424 = vpop.f32.mrf.mxu0
        %v425 = vadd.f32 %v250, %v424
        %426 = vmatprep.mubr.f32.mxu0 0.0
        %427 = vmatmul.mubr.f32.gmra.mxu0 %v285
        %v428 = vpop.f32.mrf.mxu0
        %v429 = vadd.f32 %v246, %v428
        %v430 = vpop.f32.mrf.mxu0
        %v431 = vadd.f32 %v250, %v430
        %432 = vmatprep.mubr.f32.mxu0 0.0
        %433 = vmatmul.mubr.f32.gmra.mxu0 %v288
        %v434 = vpop.f32.mrf.mxu0
        %v435 = vadd.f32 %v246, %v434
        %v436 = vpop.f32.mrf.mxu0
        %v437 = vadd.f32 %v250, %v436
        %438 = vmatprep.mubr.f32.mxu0 0.0
        %439 = vmatmul.mubr.f32.gmra.mxu0 %v291
        %v440 = vpop.f32.mrf.mxu0
        %v441 = vadd.f32 %v246, %v440
        %v442 = vpop.f32.mrf.mxu0
        %v443 = vadd.f32 %v250, %v442
        %444 = vmatprep.mubr.f32.mxu0 0.0
        %445 = vmatmul.mubr.f32.gmra.mxu0 %v294
        %v446 = vpop.f32.mrf.mxu0
        %v447 = vadd.f32 %v246, %v446
        %v448 = vpop.f32.mrf.mxu0
        %v449 = vadd.f32 %v250, %v448
        %450 = vmatprep.mubr.f32.mxu0 0.0
        %451 = vmatmul.mubr.f32.gmra.mxu0 %v297
        %v452 = vpop.f32.mrf.mxu0
        %v453 = vadd.f32 %v246, %v452
        %v454 = vpop.f32.mrf.mxu0
        %v455 = vadd.f32 %v250, %v454
        %456 = vmatprep.mubr.f32.mxu0 0.0
        %457 = vmatmul.mubr.f32.gmra.mxu0 %v300
        %v458 = vpop.f32.mrf.mxu0
        %v459 = vadd.f32 %v246, %v458
        %v460 = vpop.f32.mrf.mxu0
        %v461 = vadd.f32 %v250, %v460
        %462 = vdwg.mxu0
        %v463 = vmax.f32 %v371, 0.0
        %v464 = vmax.f32 %v377, 0.0
        %v465 = vmax.f32 %v383, 0.0
        %v466 = vmax.f32 %v389, 0.0
        %v467 = vmax.f32 %v395, 0.0
        %v468 = vmax.f32 %v401, 0.0
        %v469 = vmax.f32 %v407, 0.0
        %v470 = vmax.f32 %v413, 0.0
        %v471 = vmax.f32 %v419, 0.0
        %v472 = vmax.f32 %v425, 0.0
        %v473 = vmax.f32 %v431, 0.0
        %v474 = vmax.f32 %v437, 0.0
        %v475 = vmax.f32 %v443, 0.0
        %v476 = vmax.f32 %v449, 0.0
        %v477 = vmax.f32 %v455, 0.0
        %v478 = vmax.f32 %v461, 0.0
        %v479 = vadd.f32 %v463, 0.0001
        %v480 = vadd.f32 %v464, 0.0001
        %v481 = vadd.f32 %v465, 0.0001
        %v482 = vadd.f32 %v466, 0.0001
        %v483 = vadd.f32 %v467, 0.0001
        %v484 = vadd.f32 %v468, 0.0001
        %v485 = vadd.f32 %v469, 0.0001
        %v486 = vadd.f32 %v470, 0.0001
        %v487 = vadd.f32 %v471, 0.0001
        %v488 = vadd.f32 %v472, 0.0001
        %v489 = vadd.f32 %v473, 0.0001
        %v490 = vadd.f32 %v474, 0.0001
        %v491 = vadd.f32 %v475, 0.0001
        %v492 = vadd.f32 %v476, 0.0001
        %v493 = vadd.f32 %v477, 0.0001
        %v494 = vadd.f32 %v478, 0.0001
        %v495 = vld [vmem:[%s218] sm:$0xff]
        %v496 = vld [vmem:[%s218 + $0x8] sm:$0xff]
        %v497 = vld [vmem:[%s218 + $0x10] sm:$0xff]
        %v498 = vld [vmem:[%s218 + $0x18] sm:$0xff]
        %v499 = vld [vmem:[%s218 + $0x20] sm:$0xff]
        %v500 = vld [vmem:[%s218 + $0x28] sm:$0xff]
        %v501 = vld [vmem:[%s218 + $0x30] sm:$0xff]
        %v502 = vld [vmem:[%s218 + $0x38] sm:$0xff]
        %v503 = vld [vmem:[%s218 + $0x40] sm:$0xff]
        %v504 = vld [vmem:[%s218 + $0x48] sm:$0xff]
        %v505 = vld [vmem:[%s218 + $0x50] sm:$0xff]
        %v506 = vld [vmem:[%s218 + $0x58] sm:$0xff]
        %v507 = vld [vmem:[%s218 + $0x60] sm:$0xff]
        %v508 = vld [vmem:[%s218 + $0x68] sm:$0xff]
        %v509 = vld [vmem:[%s218 + $0x70] sm:$0xff]
        %v510 = vld [vmem:[%s218 + $0x78] sm:$0xff]
        %v511 = vmul.f32 %v495, %v479
        %v512 = vmul.f32 %v496, %v480
        %v513 = vmul.f32 %v497, %v481
        %v514 = vmul.f32 %v498, %v482
        %v515 = vmul.f32 %v499, %v483
        %v516 = vmul.f32 %v500, %v484
        %v517 = vmul.f32 %v501, %v485
        %v518 = vmul.f32 %v502, %v486
        %v519 = vmul.f32 %v503, %v487
        %v520 = vmul.f32 %v504, %v488
        %v521 = vmul.f32 %v505, %v489
        %v522 = vmul.f32 %v506, %v490
        %v523 = vmul.f32 %v507, %v491
        %v524 = vmul.f32 %v508, %v492
        %v525 = vmul.f32 %v509, %v493
        %v526 = vmul.f32 %v510, %v494
        %v527 = vadd.f32 %v511, %v369
        %v528 = vadd.f32 %v512, %v375
        %v529 = vadd.f32 %v513, %v381
        %v530 = vadd.f32 %v514, %v387
        %v531 = vadd.f32 %v515, %v393
        %v532 = vadd.f32 %v516, %v399
        %v533 = vadd.f32 %v517, %v405
        %v534 = vadd.f32 %v518, %v411
        %v535 = vadd.f32 %v519, %v417
        %v536 = vadd.f32 %v520, %v423
        %v537 = vadd.f32 %v521, %v429
        %v538 = vadd.f32 %v522, %v435
        %v539 = vadd.f32 %v523, %v441
        %v540 = vadd.f32 %v524, %v447
        %v541 = vadd.f32 %v525, %v453
        %v542 = vadd.f32 %v526, %v459
        %543 = vst [vmem:[%s207] sm:$0xff] %v527
        %544 = vst [vmem:[%s207 + $0x8] sm:$0xff] %v528
        %545 = vst [vmem:[%s207 + $0x10] sm:$0xff] %v529
        %546 = vst [vmem:[%s207 + $0x18] sm:$0xff] %v530
        %547 = vst [vmem:[%s207 + $0x20] sm:$0xff] %v531
        %548 = vst [vmem:[%s207 + $0x28] sm:$0xff] %v532
        %549 = vst [vmem:[%s207 + $0x30] sm:$0xff] %v533
        %550 = vst [vmem:[%s207 + $0x38] sm:$0xff] %v534
        %551 = vst [vmem:[%s207 + $0x40] sm:$0xff] %v535
        %552 = vst [vmem:[%s207 + $0x48] sm:$0xff] %v536
        %553 = vst [vmem:[%s207 + $0x50] sm:$0xff] %v537
        %554 = vst [vmem:[%s207 + $0x58] sm:$0xff] %v538
        %555 = vst [vmem:[%s207 + $0x60] sm:$0xff] %v539
        %556 = vst [vmem:[%s207 + $0x68] sm:$0xff] %v540
        %557 = vst [vmem:[%s207 + $0x70] sm:$0xff] %v541
        %558 = vst [vmem:[%s207 + $0x78] sm:$0xff] %v542
        %s559 = sand.u32 %s120, 1
        %s560 = scalar_lea.sflag [#allocation3], %s559
        %s561 = sand.u32 %s120, 1
        %s562 = smul.addr %s561, 128
        %s563 = scalar_lea.vmem [#allocation2], %s562
        // Predicated region
        $region37: #{tpu_custom_call.1} parent=35 // pred_check
          %p564 = pneg %p130
        $region38: #{tpu_custom_call.1} parent=35 // pred_check_branch
          %566 = sbr.rel (%p564) target = $region40
        $region39: #{tpu_custom_call.1} parent=35 // pred_region
          %s567 = smul.u32 16, %s18
          %s569 = ssub.s32 2048, 2048
          %570 = vsyncadd %s560, %s569
          %s571 = smul.addr %s567, 128
          %s572 = scalar_lea.hbm %s4, %s571
          %s573 = sshll.u32 %s563, 4
          %s574 = int_to_ptr.vmem [resolvable:$true] %s573
          %579 = dma.vmem_to_hbm [thread:$0]  %s574, 2048, %s572, %s560, 128, 128, 8
        $region40: #{tpu_custom_call.1} parent=35 // pred_fallthru
          _
      $region36: #{tpu_custom_call.1} parent=5 // pred_fallthru
        _
      %p580 = scmp.le.s32.totalorder 2, %s13
      // Predicated region
      $region41: #{tpu_custom_call.1} parent=5 // pred_check
        %p581 = pneg %p580
      $region42: #{tpu_custom_call.1} parent=5 // pred_check_branch
        %583 = sbr.rel (%p581) target = $region44
      $region43: #{tpu_custom_call.1} parent=5 // pred_region
        %s584 = ssub.s32 %s13, 2
        // Predicated region
        $region45: #{tpu_custom_call.1} parent=43 // pred_check
          %p585 = pneg %p136
        $region46: #{tpu_custom_call.1} parent=43 // pred_check_branch
          %587 = sbr.rel (%p585) target = $region48
        $region47: #{tpu_custom_call.1} parent=43 // pred_region
          %s588 = sand.u32 %s121, 1
          %s589 = scalar_lea.sflag [#allocation3], %s588
          %s590 = sand.u32 %s121, 1
          %s591 = smul.addr %s590, 128
          %s592 = scalar_lea.vmem [#allocation2], %s591
          %593 = dma.done %s589, 2048
        $region48: #{tpu_custom_call.1} parent=43 // pred_fallthru
          _
      $region44: #{tpu_custom_call.1} parent=5 // pred_fallthru
        _
    $region6: #{tpu_custom_call.1} parent=1 // loop_footer
      %s17 = sadd.s32 1, %s13
    $region7: #{tpu_custom_call.1} parent=1 // loop_footer_branch
      %12 = sbr.rel target = $region3
    $region8: #{tpu_custom_call.1} parent=1 // loop_exit
      _
    %594 = vsyncpa [#allocation3], 1
    %s595 = scalar_lea.sflag [#allocation3], 1
    %596 = vsyncpa %s595, 1

</llo_original>
